<compile_context>
chip_gen: v6e
topology: v6e:2x2x1
jax: 0.10.0
libtpu: 0.0.40
codegen_flags: <defaults>
</compile_context>

<pallas_src>
import functools

import jax
import jax.numpy as jnp
from jax import lax
from jax.experimental import pallas as pl
from jax.experimental.pallas import tpu as pltpu

_MIB = 1024 * 1024


def _deconv_matmul_kernel(x_ref, w_ref, b_ref, o_ref):
    # x_ref: (Cin, tm)      native NCDHW slice of the input (channels-first)
    # w_ref: (8*Cout, Cin)  resident weight, rows ordered (co, kd, kh, kw)
    # b_ref: (8*Cout, 1)    bias broadcast over the 8 kernel taps (f32)
    # o_ref: (8*Cout, tm)   lane-dense output tile (lanes = M tile)
    acc = jnp.dot(w_ref[...], x_ref[...], preferred_element_type=jnp.float32)
    o_ref[...] = (acc + b_ref[...]).astype(o_ref.dtype)


def _vmem_params():
    """Generation-aware VMEM budget / scoped limit / grid-step floor / max lane tile."""
    cap = 64 * _MIB  # conservative fallback (v7x-sized) if the query is unavailable
    try:
        cap = int(getattr(pltpu.get_tpu_info(), "vmem_capacity_bytes", cap)) or cap
    except Exception:
        pass
    big = cap > 96 * _MIB              # 128 MiB -> v5e/v6e (1 TensorCore); 64 MiB -> v7x (2 TCs)
    budget = int(cap * (0.62 if big else 0.42))   # bytes the pipelined tiles may occupy
    limit = int(cap * 0.78)                       # scoped-VMEM limit handed to Mosaic
    min_steps = 2 if big else 4                   # keep every TC + its double buffer busy
    tm_cap = 16384 if big else 8192
    return budget, limit, min_steps, tm_cap


def _pick_m_tile(n, m, cin, kout, itemsize, tm_max, budget, min_steps):
    """Largest lane tile (multiple of 128) fitting the VMEM budget, shrunk only far enough
    that the grid keeps `min_steps` steps (2 on single-TC chips, 4 on v7x)."""
    fixed = (kout * cin + kout) * itemsize        # resident weight + bias, single-buffered
    per_col = 2 * (cin + kout) * itemsize         # x + out columns, double-buffered
    tm = max(budget - fixed, 128 * per_col) // per_col
    tm = max(128, min(int(tm), int(tm_max)) // 128 * 128)
    tm = min(tm, pl.cdiv(m, 128) * 128)           # never bigger than (rounded-up) M
    while n * pl.cdiv(m, tm) < min_steps and tm > 256:
        tm = max(256, tm // 2 // 128 * 128)
    return tm


@functools.partial(jax.jit, static_argnames=("tm_max", "compute_dtype"))
def single_deconv3d_block(x, weight, bias, *, tm_max=None, compute_dtype=None):
    """ConvTranspose3d(kernel=2, stride=2, padding=0, output_padding=0).

    Args:
      x:      [N, Cin, D, H, W]      (NCDHW, like PyTorch)
      weight: [Cin, Cout, 2, 2, 2]   (PyTorch ConvTranspose3d weight layout)
      bias:   [Cout]
      compute_dtype: e.g. jnp.bfloat16 to halve input-side HBM traffic (MXU accumulation
        stays f32, output stays x.dtype).  Default None keeps the module's f32 numerics.
    Returns:
      y:      [N, Cout, 2D, 2H, 2W]
    """
    N, Cin, D, H, W = x.shape
    Cout = weight.shape[1]
    Kout = 8 * Cout
    M = D * H * W
    out_dtype = x.dtype

    # Free, contiguous reshape: NCDHW -> [N, Cin, M].  No transpose/copy of x in HBM.
    x3 = x.reshape(N, Cin, M)
    # Tiny one-off weight/bias reshuffles: rows ordered (co, kd, kh, kw).
    wq = jnp.transpose(weight, (1, 2, 3, 4, 0)).reshape(Kout, Cin)
    b2 = jnp.repeat(bias.astype(jnp.float32), 8).reshape(Kout, 1)

    if compute_dtype is not None:
        x3 = x3.astype(compute_dtype)
        wq = wq.astype(compute_dtype)

    budget, vmem_limit, min_steps, tm_cap = _vmem_params()
    if tm_max is None:
        tm_max = tm_cap
    itemsize = max(jnp.dtype(x3.dtype).itemsize, jnp.dtype(out_dtype).itemsize)
    tm = _pick_m_tile(N, M, Cin, Kout, itemsize, tm_max, budget, min_steps)
    num_m_tiles = pl.cdiv(M, tm)   # ragged tail handled by Pallas edge-block masking (no pad)

    cost = pl.CostEstimate(
        flops=2 * N * M * Cin * Kout,
        transcendentals=0,
        bytes_accessed=(N * Cin * M * jnp.dtype(x3.dtype).itemsize
                        + Kout * Cin * jnp.dtype(wq.dtype).itemsize
                        + Kout * 4
                        + N * Kout * M * jnp.dtype(out_dtype).itemsize),
    )

    y3 = pl.pallas_call(
        _deconv_matmul_kernel,
        out_shape=jax.ShapeDtypeStruct((N, Kout, M), out_dtype),
        grid_spec=pltpu.PrefetchScalarGridSpec(
            num_scalar_prefetch=0,
            # M-tile axis leads so the megacore "parallel" shard stays balanced when N is
            # 1 or odd; both axes are fully independent.
            grid=(num_m_tiles, N),
            in_specs=[
                pl.BlockSpec((None, Cin, tm), lambda m, n: (n, 0, m)),
                # Constant index_maps + single buffering: weight/bias are DMA'd once and
                # stay resident without a second (wasted) VMEM copy.
                pl.BlockSpec((Kout, Cin), lambda m, n: (0, 0),
                             pipeline_mode=pl.Buffered(1)),
                pl.BlockSpec((Kout, 1), lambda m, n: (0, 0),
                             pipeline_mode=pl.Buffered(1)),
            ],
            out_specs=pl.BlockSpec((None, Kout, tm), lambda m, n: (n, 0, m)),
        ),
        compiler_params=pltpu.CompilerParams(
            dimension_semantics=("parallel", "parallel"),
            vmem_limit_bytes=vmem_limit,
        ),
        cost_estimate=cost,
    )(x3, wq, b2)

    # Glue: interleave the 2x2x2 taps into the upsampled NCDHW volume (one XLA pass over
    # the 8x-sized output).  See TODO(synk) at the top of the file.
    y = y3.reshape(N, Cout, 2, 2, 2, D, H, W)
    y = jnp.transpose(y, (0, 1, 5, 2, 6, 3, 7, 4)).reshape(N, Cout, 2 * D, 2 * H, 2 * W)
    return y


def _reference(x, weight, bias):
    """Pure-JAX reference of ConvTranspose3d(k=2, s=2, p=0)."""
    N, Cin, D, H, W = x.shape
    Cout = weight.shape[1]
    y = jnp.einsum("ncdhw,cokij->nodkhiwj", x, weight,
                   precision=lax.Precision.HIGHEST)
    return y.reshape(N, Cout, 2 * D, 2 * H, 2 * W) + bias[None, :, None, None, None]


if __name__ == "__main__":
    def make_inputs(key, n, cin, cout, d, h, w):
        kx, kw_, kb = jax.random.split(key, 3)
        bound = 1.0 / ((cin * 8) ** 0.5)
        x = jax.random.normal(kx, (n, cin, d, h, w), dtype=jnp.float32)
        weight = jax.random.uniform(kw_, (cin, cout, 2, 2, 2),
                                    minval=-bound, maxval=bound, dtype=jnp.float32)
        bias = jax.random.uniform(kb, (cout,), minval=-bound, maxval=bound,
                                  dtype=jnp.float32)
        return x, weight, bias

    k1, k2, k3 = jax.random.split(jax.random.PRNGKey(0), 3)

    # 1) UNETR-like decoder stage (32 -> 16 channels), M a multiple of the lane tile.
    x, w, b = make_inputs(k1, 2, 32, 16, 8, 8, 8)
    y = jax.block_until_ready(single_deconv3d_block(x, w, b))
    y_ref = _reference(x, w, b)
    assert y.shape == (2, 16, 16, 16, 16), y.shape
    assert jnp.allclose(y, y_ref, atol=1e-4, rtol=1e-4), \
        float(jnp.max(jnp.abs(y - y_ref)))

    # 2) Ragged spatial size (M = 4*6*7 = 168): exercises the no-pad tail-block masking.
    x, w, b = make_inputs(k2, 1, 16, 8, 4, 6, 7)
    y = jax.block_until_ready(single_deconv3d_block(x, w, b))
    y_ref = _reference(x, w, b)
    assert y.shape == (1, 8, 8, 12, 14), y.shape
    assert jnp.allclose(y, y_ref, atol=1e-4, rtol=1e-4), \
        float(jnp.max(jnp.abs(y - y_ref)))

    # 3) Opt-in bf16 inputs (f32 accumulation, f32 output): bandwidth lever, looser tol.
    x, w, b = make_inputs(k3, 2, 32, 16, 8, 8, 8)
    y = jax.block_until_ready(single_deconv3d_block(x, w, b, compute_dtype=jnp.bfloat16))
    y_ref = _reference(x, w, b)
    assert jnp.allclose(y, y_ref, atol=3e-2, rtol=3e-2), \
        float(jnp.max(jnp.abs(y - y_ref)))

    print("KERNEL_OK")
</pallas_src>

<mosaic_0001>
module attributes {stable_mosaic.version = 11 : i64} {
  func.func @_deconv_matmul_kernel(%arg0: i32, %arg1: i32, %arg2: memref<1x32x256xf32, #tpu.memory_space<vmem>>, %arg3: memref<128x32xf32, #tpu.memory_space<vmem>>, %arg4: memref<128x1xf32, #tpu.memory_space<vmem>>, %arg5: memref<1x128x256xf32, #tpu.memory_space<vmem>>) attributes {dimension_semantics = [#tpu.dimension_semantics<parallel>, #tpu.dimension_semantics<parallel>], iteration_bounds = array<i64: 2, 2>, scalar_prefetch = 0 : i64, scratch_operands = 0 : i64, tpu.core_type = #tpu.core_type<tc>, window_params = [{transform_indices = @transform_0, window_bounds = array<i64: 1, 32, 256>}, {pipeline_mode = #tpu.pipeline_mode<synchronous>, transform_indices = @transform_1, window_bounds = array<i64: 128, 32>}, {pipeline_mode = #tpu.pipeline_mode<synchronous>, transform_indices = @transform_2, window_bounds = array<i64: 128, 1>}, {transform_indices = @transform_3, window_bounds = array<i64: 1, 128, 256>}]} {
    %c0 = arith.constant 0 : index
    %c0_0 = arith.constant 0 : index
    %0 = vector.load %arg3[%c0, %c0_0] : memref<128x32xf32, #tpu.memory_space<vmem>>, vector<128x32xf32>
    %c0_1 = arith.constant 0 : index
    %c0_2 = arith.constant 0 : index
    %c0_3 = arith.constant 0 : index
    %1 = vector.load %arg2[%c0_1, %c0_2, %c0_3] : memref<1x32x256xf32, #tpu.memory_space<vmem>>, vector<1x32x256xf32>
    %2 = vector.shape_cast %1 : vector<1x32x256xf32> to vector<32x256xf32>
    %cst = arith.constant dense<0.000000e+00> : vector<128x256xf32>
    %3 = tpu.matmul %0, %2, %cst {dimension_numbers = #tpu.dot_dimension_numbers<[1], [0], [0], [1], [0, 0, 1, 1], [], []>} : vector<128x32xf32>, vector<32x256xf32>, vector<128x256xf32> -> vector<128x256xf32>
    %c0_4 = arith.constant 0 : index
    %c0_5 = arith.constant 0 : index
    %4 = vector.load %arg4[%c0_4, %c0_5] : memref<128x1xf32, #tpu.memory_space<vmem>>, vector<128x1xf32>
    %5 = vector.broadcast %4 : vector<128x1xf32> to vector<128x256xf32>
    %6 = arith.addf %3, %5 : vector<128x256xf32>
    %c0_6 = arith.constant 0 : index
    %c0_7 = arith.constant 0 : index
    %c0_8 = arith.constant 0 : index
    %7 = vector.load %arg5[%c0_6, %c0_7, %c0_8] : memref<1x128x256xf32, #tpu.memory_space<vmem>>, vector<1x128x256xf32>
    %8 = vector.shape_cast %7 : vector<1x128x256xf32> to vector<128x256xf32>
    %9 = vector.shape_cast %6 : vector<128x256xf32> to vector<1x128x256xf32>
    tpu.vector_store %arg5[%c0_6, %c0_7, %c0_8], %9 {strides = array<i32>} : memref<1x128x256xf32, #tpu.memory_space<vmem>>, vector<1x128x256xf32>,
    return
  }
  func.func @transform_0(%arg0: i32, %arg1: i32) -> (i32, i32, i32) {
    %c0_i32 = arith.constant 0 : i32
    %c0_i32_0 = arith.constant 0 : i32
    return %arg1, %c0_i32, %arg0 : i32, i32, i32
  }
  func.func @transform_1(%arg0: i32, %arg1: i32) -> (i32, i32) {
    %c0_i32 = arith.constant 0 : i32
    %c0_i32_0 = arith.constant 0 : i32
    %c0_i32_1 = arith.constant 0 : i32
    return %c0_i32, %c0_i32_0 : i32, i32
  }
  func.func @transform_2(%arg0: i32, %arg1: i32) -> (i32, i32) {
    %c0_i32 = arith.constant 0 : i32
    %c0_i32_0 = arith.constant 0 : i32
    %c0_i32_1 = arith.constant 0 : i32
    return %c0_i32, %c0_i32_0 : i32, i32
  }
  func.func @transform_3(%arg0: i32, %arg1: i32) -> (i32, i32, i32) {
    %c0_i32 = arith.constant 0 : i32
    %c0_i32_0 = arith.constant 0 : i32
    return %arg1, %c0_i32, %arg0 : i32, i32, i32
  }
}

</mosaic_0001>

<llo_original>
// kernel: single_deconv3d_block.1
$region0: #{single_deconv3d_block.1}
  #allocation0 [shape = 'u32[]', space=smem, size = 0x4, offset = 0x4, fixed_abs, tag = 'smem constant byte address 0x4 - core index']
  #allocation1 [shape = 'u32[144,128]{1,0:T(1,128)}', space=vmem, size = 0x12000, scoped, tag = 'internal scratch']
  %s0 = inlined_call_operand.vmem [shape: f32[2,32,512], index: 0, kind: input, shape index: {}]
  %s1 = inlined_call_operand.hbm [shape: f32[128,32], index: 1, kind: input, shape index: {}]
  %s2 = inlined_call_operand.vmem [shape: f32[128,1], index: 2, kind: input, shape index: {}]
  %s3 = inlined_call_operand.vmem [shape: f32[2,128,512], index: 3, kind: output, shape index: {}]
  %s4 = sld [smem:[#allocation0]]
  $region91: #{single_deconv3d_block.1} parent=0
    _
  %s6 = ssub.s32 1, %s4
  %s7 = scalar_select 0, %s6, %s4
  $region1: #{single_deconv3d_block.1} parent=0
    #allocation2 [shape = 'u8[65536]{0}', space=vmem, size = 0x10000, scoped, tag = 'input window, operand 0']
    #allocation3 [shape = 'u8[65536]{0}', space=vmem, size = 0x10000, scoped, tag = 'input window, operand 1, single buffered']
    #allocation4 [shape = 's32[2]{0}', space=sflag, size = 0x8, scoped, tag = 'scoped memory for single_deconv3d_block.1']
    #allocation5 [shape = 'u8[262144]{0}', space=vmem, size = 0x40000, scoped, tag = 'output window, operand 0']
    %8 = vsyncpa [#allocation4], 0
    loop: start=0, step=1, limit=6
    $region2: #{single_deconv3d_block.1} parent=1 // loop_pre_header
      _
    $region3: #{single_deconv3d_block.1} parent=1 // loop_header
      %s10 = sphi 0, %s14
      %p11 = scmp.ge.s32.totalorder %s10, 6
      %s17 = sphi 0, %s29
      %s18 = sphi 0, %s25
      %s19 = sphi 0, %s17
      %s20 = sphi 0, %s18
      %s21 = sphi 0, %s19
      %s22 = sphi 0, %s20
      %s34 = sphi 0, %s36
      %s37 = sphi 0, %s34
      %s38 = sphi 0, %s37
      %s54 = sphi 0, %s38
      %s58 = sphi 0, %s58
      %s60 = sphi 0, %s58
      %s61 = sphi 0, %s60
      %s75 = sphi 0, %s61
      %s79 = sphi 0, %s79
      %s81 = sphi 0, %s79
      %s82 = sphi 0, %s81
      %s96 = sphi 0, %s82
      %s104 = sphi 0, %s106
      %s107 = sphi 0, %s104
      %s108 = sphi 0, %s107
      %s124 = sphi 0, %s108
    $region4: #{single_deconv3d_block.1} parent=1 // loop_header_branch
      %13 = sbr.rel (%p11) target = $region8
    $region5: #{single_deconv3d_block.1} parent=1 // loop_body
      %s15 = ssub.s32 %s10, 1
      %s16 = ssub.s32 %s10, 2
      %s23 = sadd.s32 1, %s18
      %p24 = scmp.ge.s32.totalorder %s23, 2
      %s25 = scalar_select %p24, 0, %s23
      %s26 = sadd.s32 1, %s17
      %s27 = scalar_select %p24, %s26, %s17
      %p28 = scmp.ge.s32.totalorder %s27, 2
      %s29 = scalar_select %p28, 0, %s27
      %s30 = ssub.s32 %s18, %s25
      %s31 = ssub.s32 %s17, %s29
      %s32 = sor.u32 %s30, %s31
      %p33 = scmp.eq.s32.totalorder %s32, 0
      %s35 = sadd.s32 %s34, 1
      %s36 = scalar_select %p33, %s34, %s35
      %p39 = pneg %p33
      %p40 = scmp.eq.s32.totalorder %s10, 3
      %p41 = por %p39, %p40
      %p42 = scmp.ne.s32.totalorder %s34, %s37
      %p43 = scmp.eq.s32.totalorder %s10, 0
      %p44 = por %p42, %p43
      %p45 = scmp.ne.s32.totalorder %s34, %s37
      %p46 = scmp.eq.s32.totalorder %s15, 3
      %p47 = por %p45, %p46
      %p48 = scmp.ne.s32.totalorder %s37, %s38
      %p49 = scmp.eq.s32.totalorder %s15, 0
      %p50 = por %p48, %p49
      %p51 = scmp.ne.s32.totalorder %s37, %s38
      %p52 = scmp.eq.s32.totalorder %s16, 3
      %p53 = por %p51, %p52
      %p55 = scmp.ne.s32.totalorder %s38, %s54
      %p56 = scmp.eq.s32.totalorder %s16, 0
      %p57 = por %p55, %p56
      %s59 = sadd.s32 %s58, 1
      %p62 = scmp.eq.s32.totalorder %s10, 3
      %p63 = scmp.ne.s32.totalorder %s58, %s60
      %p64 = scmp.eq.s32.totalorder %s10, 0
      %p65 = por %p63, %p64
      %p66 = scmp.ne.s32.totalorder %s58, %s60
      %p67 = scmp.eq.s32.totalorder %s15, 3
      %p68 = por %p66, %p67
      %p69 = scmp.ne.s32.totalorder %s60, %s61
      %p70 = scmp.eq.s32.totalorder %s15, 0
      %p71 = por %p69, %p70
      %p72 = scmp.ne.s32.totalorder %s60, %s61
      %p73 = scmp.eq.s32.totalorder %s16, 3
      %p74 = por %p72, %p73
      %p76 = scmp.ne.s32.totalorder %s61, %s75
      %p77 = scmp.eq.s32.totalorder %s16, 0
      %p78 = por %p76, %p77
      %s80 = sadd.s32 %s79, 1
      %p83 = scmp.eq.s32.totalorder %s10, 3
      %p84 = scmp.ne.s32.totalorder %s79, %s81
      %p85 = scmp.eq.s32.totalorder %s10, 0
      %p86 = por %p84, %p85
      %p87 = scmp.ne.s32.totalorder %s79, %s81
      %p88 = scmp.eq.s32.totalorder %s15, 3
      %p89 = por %p87, %p88
      %p90 = scmp.ne.s32.totalorder %s81, %s82
      %p91 = scmp.eq.s32.totalorder %s15, 0
      %p92 = por %p90, %p91
      %p93 = scmp.ne.s32.totalorder %s81, %s82
      %p94 = scmp.eq.s32.totalorder %s16, 3
      %p95 = por %p93, %p94
      %p97 = scmp.ne.s32.totalorder %s82, %s96
      %p98 = scmp.eq.s32.totalorder %s16, 0
      %p99 = por %p97, %p98
      %s100 = ssub.s32 %s18, %s25
      %s101 = ssub.s32 %s17, %s29
      %s102 = sor.u32 %s100, %s101
      %p103 = scmp.eq.s32.totalorder %s102, 0
      %s105 = sadd.s32 %s104, 1
      %s106 = scalar_select %p103, %s104, %s105
      %p109 = pneg %p103
      %p110 = scmp.eq.s32.totalorder %s10, 3
      %p111 = por %p109, %p110
      %p112 = scmp.ne.s32.totalorder %s104, %s107
      %p113 = scmp.eq.s32.totalorder %s10, 0
      %p114 = por %p112, %p113
      %p115 = scmp.ne.s32.totalorder %s104, %s107
      %p116 = scmp.eq.s32.totalorder %s15, 3
      %p117 = por %p115, %p116
      %p118 = scmp.ne.s32.totalorder %s107, %s108
      %p119 = scmp.eq.s32.totalorder %s15, 0
      %p120 = por %p118, %p119
      %p121 = scmp.ne.s32.totalorder %s107, %s108
      %p122 = scmp.eq.s32.totalorder %s16, 3
      %p123 = por %p121, %p122
      %p125 = scmp.ne.s32.totalorder %s108, %s124
      %p126 = scmp.eq.s32.totalorder %s16, 0
      %p127 = por %p125, %p126
      %p128 = scmp.le.s32.totalorder 1, %s10
      %p129 = scmp.lt.s32.totalorder %s10, 5
      %p130 = pnand %p128, %p129
      %p131 = pneg %p130
      // Predicated region
      $region9: #{single_deconv3d_block.1} parent=5 // pred_check
        _
      $region10: #{single_deconv3d_block.1} parent=5 // pred_check_branch
        %133 = sbr.rel (%p130) target = $region12
      $region11: #{single_deconv3d_block.1} parent=5 // pred_region
        %s134 = ssub.s32 %s10, 1
        // Predicated region
        $region13: #{single_deconv3d_block.1} parent=11 // pred_check
          %p135 = pneg %p71
        $region14: #{single_deconv3d_block.1} parent=11 // pred_check_branch
          %137 = sbr.rel (%p135) target = $region16
        $region15: #{single_deconv3d_block.1} parent=11 // pred_region
          %s139 = ssub.s32 2048, 2048
          %140 = vsyncadd [#allocation4], %s139
          %s141 = sshll.u32 [#allocation3], 4
          %s142 = int_to_ptr.vmem [resolvable:$true] %s141
          %147 = dma.hbm_to_vmem [thread:$0]  %s1, 2048, %s142, [#allocation4], 128, 128, 8
        $region16: #{single_deconv3d_block.1} parent=11 // pred_fallthru
          _
        // Predicated region
        $region17: #{single_deconv3d_block.1} parent=11 // pred_check
          %p148 = pneg %p92
        $region18: #{single_deconv3d_block.1} parent=11 // pred_check_branch
          %150 = sbr.rel (%p148) target = $region20
        $region19: #{single_deconv3d_block.1} parent=11 // pred_region
          _
        $region20: #{single_deconv3d_block.1} parent=11 // pred_fallthru
          _
      $region12: #{single_deconv3d_block.1} parent=5 // pred_fallthru
        _
      %p151 = scmp.lt.s32.totalorder %s10, 4
      // Predicated region
      $region21: #{single_deconv3d_block.1} parent=5 // pred_check
        %p152 = pneg %p151
      $region22: #{single_deconv3d_block.1} parent=5 // pred_check_branch
        %154 = sbr.rel (%p152) target = $region24
      $region23: #{single_deconv3d_block.1} parent=5 // pred_region
        // Predicated region
        $region25: #{single_deconv3d_block.1} parent=23 // pred_check
          %p155 = pneg %p44
        $region26: #{single_deconv3d_block.1} parent=23 // pred_check_branch
          %157 = sbr.rel (%p155) target = $region28
        $region27: #{single_deconv3d_block.1} parent=23 // pred_region
          %s158 = sand.u32 %s34, 1
          %s159 = sand.u32 %s34, 1
          %s160 = smul.addr %s159, 64
          %s161 = scalar_lea.vmem [#allocation2], %s160
          %s162 = smul.u32 2, %s17
          %s163 = smul.addr %s18, 16
          %s164 = sadd.s32 %s162, %s163
          %s165 = smul.addr %s164, 8
          %s166 = scalar_lea.vmem %s0, %s165
          // Predicated region
          $region29: #{single_deconv3d_block.1} parent=27 // pred_check
            _
          $region30: #{single_deconv3d_block.1} parent=27 // pred_check_branch
            %168 = sbr.rel (0) target = $region32
          $region31: #{single_deconv3d_block.1} parent=27 // pred_region
            // Predicated region
            $region33: #{single_deconv3d_block.1} parent=31 // pred_check
              _
            $region34: #{single_deconv3d_block.1} parent=31 // pred_check_branch
              %170 = sbr.rel (0) target = $region36
            $region35: #{single_deconv3d_block.1} parent=31 // pred_region
              loop: start=0, step=1, limit=1
              $region37: #{single_deconv3d_block.1} parent=35 // loop_pre_header
                _
              $region38: #{single_deconv3d_block.1} parent=35 // loop_header
                %s172 = sphi 0, %s176
                %p173 = scmp.ge.s32.totalorder %s172, 1
                %s177 = sphi %s166, %s166
                %s178 = sphi %s161, %s161
              $region39: #{single_deconv3d_block.1} parent=35 // loop_header_branch
                %175 = sbr.rel (%p173) target = $region43
              $region40: #{single_deconv3d_block.1} parent=35 // loop_body
                %v179 = vld [vmem:[%s177] sm:$0xff]
                %180 = vst [vmem:[%s178] sm:$0xff] %v179
                %v181 = vld [vmem:[%s177 + $0x8] sm:$0xff]
                %182 = vst [vmem:[%s178 + $0x8] sm:$0xff] %v181
                %v183 = vld [vmem:[%s177 + $0x20] sm:$0xff]
                %184 = vst [vmem:[%s178 + $0x10] sm:$0xff] %v183
                %v185 = vld [vmem:[%s177 + $0x28] sm:$0xff]
                %186 = vst [vmem:[%s178 + $0x18] sm:$0xff] %v185
                %v187 = vld [vmem:[%s177 + $0x40] sm:$0xff]
                %188 = vst [vmem:[%s178 + $0x20] sm:$0xff] %v187
                %v189 = vld [vmem:[%s177 + $0x48] sm:$0xff]
                %190 = vst [vmem:[%s178 + $0x28] sm:$0xff] %v189
                %v191 = vld [vmem:[%s177 + $0x60] sm:$0xff]
                %192 = vst [vmem:[%s178 + $0x30] sm:$0xff] %v191
                %v193 = vld [vmem:[%s177 + $0x68] sm:$0xff]
                %194 = vst [vmem:[%s178 + $0x38] sm:$0xff] %v193
              $region41: #{single_deconv3d_block.1} parent=35 // loop_footer
                %s176 = sadd.s32 1, %s172
              $region42: #{single_deconv3d_block.1} parent=35 // loop_footer_branch
                %171 = sbr.rel target = $region38
              $region43: #{single_deconv3d_block.1} parent=35 // loop_exit
                _
            $region36: #{single_deconv3d_block.1} parent=31 // pred_fallthru
              _
            // Predicated region
            $region44: #{single_deconv3d_block.1} parent=31 // pred_check
              _
            $region45: #{single_deconv3d_block.1} parent=31 // pred_check_branch
              %196 = sbr.rel target = $region47
            $region46: #{single_deconv3d_block.1} parent=31 // pred_region
              _
            $region47: #{single_deconv3d_block.1} parent=31 // pred_fallthru
              _
          $region32: #{single_deconv3d_block.1} parent=27 // pred_fallthru
            _
          %197 = vnop
        $region28: #{single_deconv3d_block.1} parent=23 // pred_fallthru
          _
      $region24: #{single_deconv3d_block.1} parent=5 // pred_fallthru
        _
      %p198 = scmp.le.s32.totalorder 1, %s10
      %p199 = scmp.lt.s32.totalorder %s10, 5
      %p200 = pnand %p198, %p199
      %p201 = pneg %p200
      // Predicated region
      $region48: #{single_deconv3d_block.1} parent=5 // pred_check
        _
      $region49: #{single_deconv3d_block.1} parent=5 // pred_check_branch
        %203 = sbr.rel (%p200) target = $region51
      $region50: #{single_deconv3d_block.1} parent=5 // pred_region
        %s204 = ssub.s32 %s10, 1
        %s205 = sand.u32 %s37, 1
        %s206 = sand.u32 %s37, 1
        %s207 = smul.addr %s206, 64
        %s208 = scalar_lea.vmem [#allocation2], %s207
        // Predicated region
        $region52: #{single_deconv3d_block.1} parent=50 // pred_check
          %p209 = pneg %p50
        $region53: #{single_deconv3d_block.1} parent=50 // pred_check_branch
          %211 = sbr.rel (%p209) target = $region55
        $region54: #{single_deconv3d_block.1} parent=50 // pred_region
          _
        $region55: #{single_deconv3d_block.1} parent=50 // pred_fallthru
          _
        // Predicated region
        $region56: #{single_deconv3d_block.1} parent=50 // pred_check
          %p212 = pneg %p71
        $region57: #{single_deconv3d_block.1} parent=50 // pred_check_branch
          %214 = sbr.rel (%p212) target = $region59
        $region58: #{single_deconv3d_block.1} parent=50 // pred_region
          %215 = dma.done [#allocation4], 2048
        $region59: #{single_deconv3d_block.1} parent=50 // pred_fallthru
          _
        %s216 = sand.u32 %s37, 1
        %s217 = sand.u32 %s37, 1
        %s218 = smul.addr %s217, 64
        %s219 = scalar_lea.vmem [#allocation2], %s218
        %p220 = pneg %p50
        %p221 = pneg %p47
        %p222 = pneg %p71
        %p223 = pneg %p68
        %p224 = pneg %p92
        %p225 = pneg %p89
        %p226 = pneg %p120
        %p227 = pneg %p117
        %s228 = sand.u32 %s107, 1
        %s229 = sand.u32 %s107, 1
        %s230 = smul.addr %s229, 256
        %s231 = scalar_lea.vmem [#allocation5], %s230
        %s232 = smul.u32 2, %s19
        %s233 = smul.u32 2, %s19
        %v234 = vld [vmem:[#allocation3] sm:$0xff]
        %v235 = vld [vmem:[#allocation3 + $0x8] sm:$0xff]
        %v236 = vld [vmem:[#allocation3 + $0x10] sm:$0xff]
        %v237 = vld [vmem:[#allocation3 + $0x18] sm:$0xff]
        %v238 = vld [vmem:[#allocation3 + $0x20] sm:$0xff]
        %v239 = vld [vmem:[#allocation3 + $0x28] sm:$0xff]
        %v240 = vld [vmem:[#allocation3 + $0x30] sm:$0xff]
        %v241 = vld [vmem:[#allocation3 + $0x38] sm:$0xff]
        %v242 = vld [vmem:[#allocation3 + $0x40] sm:$0xff]
        %v243 = vld [vmem:[#allocation3 + $0x48] sm:$0xff]
        %v244 = vld [vmem:[#allocation3 + $0x50] sm:$0xff]
        %v245 = vld [vmem:[#allocation3 + $0x58] sm:$0xff]
        %v246 = vld [vmem:[#allocation3 + $0x60] sm:$0xff]
        %v247 = vld [vmem:[#allocation3 + $0x68] sm:$0xff]
        %v248 = vld [vmem:[#allocation3 + $0x70] sm:$0xff]
        %v249 = vld [vmem:[#allocation3 + $0x78] sm:$0xff]
        %v250 = vld [vmem:[%s208] sm:$0xff]
        %v251 = vld [vmem:[%s208 + $0x8] sm:$0xff]
        %v252 = vld [vmem:[%s208 + $0x10] sm:$0xff]
        %v253 = vld [vmem:[%s208 + $0x18] sm:$0xff]
        %v254 = vld [vmem:[%s208 + $0x20] sm:$0xff]
        %v255 = vld [vmem:[%s208 + $0x28] sm:$0xff]
        %v256 = vld [vmem:[%s208 + $0x30] sm:$0xff]
        %v257 = vld [vmem:[%s208 + $0x38] sm:$0xff]
        %v258 = vld [vmem:[%s2] sm:$0xff]
        %v259 = vld [vmem:[%s2 + $0x8] sm:$0xff]
        %v260 = vld [vmem:[%s2 + $0x10] sm:$0xff]
        %v261 = vld [vmem:[%s2 + $0x18] sm:$0xff]
        %v262 = vld [vmem:[%s2 + $0x20] sm:$0xff]
        %v263 = vld [vmem:[%s2 + $0x28] sm:$0xff]
        %v264 = vld [vmem:[%s2 + $0x30] sm:$0xff]
        %v265 = vld [vmem:[%s2 + $0x38] sm:$0xff]
        %v266 = vld [vmem:[%s2 + $0x40] sm:$0xff]
        %v267 = vld [vmem:[%s2 + $0x48] sm:$0xff]
        %v268 = vld [vmem:[%s2 + $0x50] sm:$0xff]
        %v269 = vld [vmem:[%s2 + $0x58] sm:$0xff]
        %v270 = vld [vmem:[%s2 + $0x60] sm:$0xff]
        %v271 = vld [vmem:[%s2 + $0x68] sm:$0xff]
        %v272 = vld [vmem:[%s2 + $0x70] sm:$0xff]
        %v273 = vld [vmem:[%s2 + $0x78] sm:$0xff]
        %275 = vset.pattern.permute.xlu0 0
        %276 = vperm.xlu0 %275, %v258
        %v277 = vpop.permute.xlu0 %276
        %280 = vset.pattern.permute.xlu0 0
        %281 = vperm.xlu0 %280, %v259
        %v282 = vpop.permute.xlu0 %281
        %285 = vset.pattern.permute.xlu0 0
        %286 = vperm.xlu0 %285, %v260
        %v287 = vpop.permute.xlu0 %286
        %290 = vset.pattern.permute.xlu0 0
        %291 = vperm.xlu0 %290, %v261
        %v292 = vpop.permute.xlu0 %291
        %295 = vset.pattern.permute.xlu0 0
        %296 = vperm.xlu0 %295, %v262
        %v297 = vpop.permute.xlu0 %296
        %300 = vset.pattern.permute.xlu0 0
        %301 = vperm.xlu0 %300, %v263
        %v302 = vpop.permute.xlu0 %301
        %305 = vset.pattern.permute.xlu0 0
        %306 = vperm.xlu0 %305, %v264
        %v307 = vpop.permute.xlu0 %306
        %310 = vset.pattern.permute.xlu0 0
        %311 = vperm.xlu0 %310, %v265
        %v312 = vpop.permute.xlu0 %311
        %315 = vset.pattern.permute.xlu0 0
        %316 = vperm.xlu0 %315, %v266
        %v317 = vpop.permute.xlu0 %316
        %320 = vset.pattern.permute.xlu0 0
        %321 = vperm.xlu0 %320, %v267
        %v322 = vpop.permute.xlu0 %321
        %325 = vset.pattern.permute.xlu0 0
        %326 = vperm.xlu0 %325, %v268
        %v327 = vpop.permute.xlu0 %326
        %330 = vset.pattern.permute.xlu0 0
        %331 = vperm.xlu0 %330, %v269
        %v332 = vpop.permute.xlu0 %331
        %335 = vset.pattern.permute.xlu0 0
        %336 = vperm.xlu0 %335, %v270
        %v337 = vpop.permute.xlu0 %336
        %340 = vset.pattern.permute.xlu0 0
        %341 = vperm.xlu0 %340, %v271
        %v342 = vpop.permute.xlu0 %341
        %345 = vset.pattern.permute.xlu0 0
        %346 = vperm.xlu0 %345, %v272
        %v347 = vpop.permute.xlu0 %346
        %350 = vset.pattern.permute.xlu0 0
        %351 = vperm.xlu0 %350, %v273
        %v352 = vpop.permute.xlu0 %351
        %vm354 = vcmask 261120
        %v356 = vsel %vm354, %v234, 0
        %v359 = vsel %vm354, %v235, 0
        %v362 = vsel %vm354, %v236, 0
        %v365 = vsel %vm354, %v237, 0
        %v368 = vsel %vm354, %v238, 0
        %v371 = vsel %vm354, %v239, 0
        %v374 = vsel %vm354, %v240, 0
        %v377 = vsel %vm354, %v241, 0
        %v380 = vsel %vm354, %v242, 0
        %v383 = vsel %vm354, %v243, 0
        %v386 = vsel %vm354, %v244, 0
        %v389 = vsel %vm354, %v245, 0
        %v392 = vsel %vm354, %v246, 0
        %v395 = vsel %vm354, %v247, 0
        %v398 = vsel %vm354, %v248, 0
        %v401 = vsel %vm354, %v249, 0
        %403 = vmatprep.subr.mxu0 0.0
        %404 = vmatpush1.msra.mxu0 0.0
        %405 = vmatprep.subr.mxu0 0.0
        %406 = vmatpush1.msra.mxu0 0.0
        %407 = vmatprep.subr.mxu0 0.0
        %408 = vmatpush1.msra.mxu0 0.0
        %409 = vmatprep.subr.mxu0 0.0
        %410 = vmatpush1.msra.mxu0 0.0
        %411 = vmatprep.subr.mxu0 0.0
        %412 = vmatpush1.msra.mxu0 0.0
        %413 = vmatprep.subr.mxu0 0.0
        %414 = vmatpush1.msra.mxu0 0.0
        %415 = vmatprep.subr.mxu0 0.0
        %416 = vmatpush1.msra.mxu0 0.0
        %417 = vmatprep.subr.mxu0 0.0
        %418 = vmatpush1.msra.mxu0 0.0
        %419 = vmatprep.subr.mxu0 0.0
        %420 = vmatpush1.msra.mxu0 0.0
        %421 = vmatprep.subr.mxu0 0.0
        %422 = vmatpush1.msra.mxu0 0.0
        %423 = vmatprep.subr.mxu0 0.0
        %424 = vmatpush1.msra.mxu0 0.0
        %425 = vmatprep.subr.mxu0 0.0
        %426 = vmatpush1.msra.mxu0 0.0
        %427 = vmatprep.subr.mxu0 %v257
        %428 = vmatpush1.msra.mxu0 %v256
        %429 = vmatprep.subr.mxu0 %v255
        %430 = vmatpush1.msra.mxu0 %v254
        %431 = vmatprep.subr.mxu0 %v253
        %432 = vmatpush1.msra.mxu0 %v252
        %433 = vmatprep.subr.mxu0 %v251
        %434 = vmatpush1.msra.mxu0 %v250
        %435 = vmatprep.subr.mxu0 0.0
        %436 = vmatpush2.msra.mxu0 0.0
        %437 = vmatprep.subr.mxu0 0.0
        %438 = vmatpush2.msra.mxu0 0.0
        %439 = vmatprep.subr.mxu0 0.0
        %440 = vmatpush2.msra.mxu0 0.0
        %441 = vmatprep.subr.mxu0 0.0
        %442 = vmatpush2.msra.mxu0 0.0
        %443 = vmatprep.subr.mxu0 0.0
        %444 = vmatpush2.msra.mxu0 0.0
        %445 = vmatprep.subr.mxu0 0.0
        %446 = vmatpush2.msra.mxu0 0.0
        %447 = vmatprep.subr.mxu0 0.0
        %448 = vmatpush2.msra.mxu0 0.0
        %449 = vmatprep.subr.mxu0 0.0
        %450 = vmatpush2.msra.mxu0 0.0
        %451 = vmatprep.subr.mxu0 0.0
        %452 = vmatpush2.msra.mxu0 0.0
        %453 = vmatprep.subr.mxu0 0.0
        %454 = vmatpush2.msra.mxu0 0.0
        %455 = vmatprep.subr.mxu0 0.0
        %456 = vmatpush2.msra.mxu0 0.0
        %457 = vmatprep.subr.mxu0 0.0
        %458 = vmatpush2.msra.mxu0 0.0
        %459 = vmatprep.subr.mxu0 0.0
        %460 = vmatpush2.msra.mxu0 0.0
        %461 = vmatprep.subr.mxu0 0.0
        %462 = vmatpush2.msra.mxu0 0.0
        %463 = vmatprep.subr.mxu0 0.0
        %464 = vmatpush2.msra.mxu0 0.0
        %465 = vmatprep.subr.mxu0 0.0
        %466 = vmatpush2.msra.mxu0 0.0
        %467 = vmatprep.mubr.f32.mxu0 0.0
        %468 = vmatmul.mubr.f32.gmra.mxu0 %v356
        %v469 = vpop.f32.mrf.mxu0
        %v470 = vadd.f32 %v277, %v469
        %v471 = vpop.f32.mrf.mxu0
        %v472 = vadd.f32 %v277, %v471
        %473 = vmatprep.mubr.f32.mxu0 0.0
        %474 = vmatmul.mubr.f32.gmra.mxu0 %v359
        %v475 = vpop.f32.mrf.mxu0
        %v476 = vadd.f32 %v282, %v475
        %v477 = vpop.f32.mrf.mxu0
        %v478 = vadd.f32 %v282, %v477
        %479 = vmatprep.mubr.f32.mxu0 0.0
        %480 = vmatmul.mubr.f32.gmra.mxu0 %v362
        %v481 = vpop.f32.mrf.mxu0
        %v482 = vadd.f32 %v287, %v481
        %v483 = vpop.f32.mrf.mxu0
        %v484 = vadd.f32 %v287, %v483
        %485 = vmatprep.mubr.f32.mxu0 0.0
        %486 = vmatmul.mubr.f32.gmra.mxu0 %v365
        %v487 = vpop.f32.mrf.mxu0
        %v488 = vadd.f32 %v292, %v487
        %v489 = vpop.f32.mrf.mxu0
        %v490 = vadd.f32 %v292, %v489
        %491 = vmatprep.mubr.f32.mxu0 0.0
        %492 = vmatmul.mubr.f32.gmra.mxu0 %v368
        %v493 = vpop.f32.mrf.mxu0
        %v494 = vadd.f32 %v297, %v493
        %v495 = vpop.f32.mrf.mxu0
        %v496 = vadd.f32 %v297, %v495
        %497 = vmatprep.mubr.f32.mxu0 0.0
        %498 = vmatmul.mubr.f32.gmra.mxu0 %v371
        %v499 = vpop.f32.mrf.mxu0
        %v500 = vadd.f32 %v302, %v499
        %v501 = vpop.f32.mrf.mxu0
        %v502 = vadd.f32 %v302, %v501
        %503 = vmatprep.mubr.f32.mxu0 0.0
        %504 = vmatmul.mubr.f32.gmra.mxu0 %v374
        %v505 = vpop.f32.mrf.mxu0
        %v506 = vadd.f32 %v307, %v505
        %v507 = vpop.f32.mrf.mxu0
        %v508 = vadd.f32 %v307, %v507
        %509 = vmatprep.mubr.f32.mxu0 0.0
        %510 = vmatmul.mubr.f32.gmra.mxu0 %v377
        %v511 = vpop.f32.mrf.mxu0
        %v512 = vadd.f32 %v312, %v511
        %v513 = vpop.f32.mrf.mxu0
        %v514 = vadd.f32 %v312, %v513
        %515 = vmatprep.mubr.f32.mxu0 0.0
        %516 = vmatmul.mubr.f32.gmra.mxu0 %v380
        %v517 = vpop.f32.mrf.mxu0
        %v518 = vadd.f32 %v317, %v517
        %v519 = vpop.f32.mrf.mxu0
        %v520 = vadd.f32 %v317, %v519
        %521 = vmatprep.mubr.f32.mxu0 0.0
        %522 = vmatmul.mubr.f32.gmra.mxu0 %v383
        %v523 = vpop.f32.mrf.mxu0
        %v524 = vadd.f32 %v322, %v523
        %v525 = vpop.f32.mrf.mxu0
        %v526 = vadd.f32 %v322, %v525
        %527 = vmatprep.mubr.f32.mxu0 0.0
        %528 = vmatmul.mubr.f32.gmra.mxu0 %v386
        %v529 = vpop.f32.mrf.mxu0
        %v530 = vadd.f32 %v327, %v529
        %v531 = vpop.f32.mrf.mxu0
        %v532 = vadd.f32 %v327, %v531
        %533 = vmatprep.mubr.f32.mxu0 0.0
        %534 = vmatmul.mubr.f32.gmra.mxu0 %v389
        %v535 = vpop.f32.mrf.mxu0
        %v536 = vadd.f32 %v332, %v535
        %v537 = vpop.f32.mrf.mxu0
        %v538 = vadd.f32 %v332, %v537
        %539 = vmatprep.mubr.f32.mxu0 0.0
        %540 = vmatmul.mubr.f32.gmra.mxu0 %v392
        %v541 = vpop.f32.mrf.mxu0
        %v542 = vadd.f32 %v337, %v541
        %v543 = vpop.f32.mrf.mxu0
        %v544 = vadd.f32 %v337, %v543
        %545 = vmatprep.mubr.f32.mxu0 0.0
        %546 = vmatmul.mubr.f32.gmra.mxu0 %v395
        %v547 = vpop.f32.mrf.mxu0
        %v548 = vadd.f32 %v342, %v547
        %v549 = vpop.f32.mrf.mxu0
        %v550 = vadd.f32 %v342, %v549
        %551 = vmatprep.mubr.f32.mxu0 0.0
        %552 = vmatmul.mubr.f32.gmra.mxu0 %v398
        %v553 = vpop.f32.mrf.mxu0
        %v554 = vadd.f32 %v347, %v553
        %v555 = vpop.f32.mrf.mxu0
        %v556 = vadd.f32 %v347, %v555
        %557 = vmatprep.mubr.f32.mxu0 0.0
        %558 = vmatmul.mubr.f32.gmra.mxu0 %v401
        %v559 = vpop.f32.mrf.mxu0
        %v560 = vadd.f32 %v352, %v559
        %v561 = vpop.f32.mrf.mxu0
        %v562 = vadd.f32 %v352, %v561
        %563 = vdwg.mxu0
        %564 = vst [vmem:[%s231] sm:$0xff] %v470
        %565 = vst [vmem:[%s231 + $0x8] sm:$0xff] %v472
        %566 = vst [vmem:[%s231 + $0x10] sm:$0xff] %v476
        %567 = vst [vmem:[%s231 + $0x18] sm:$0xff] %v478
        %568 = vst [vmem:[%s231 + $0x20] sm:$0xff] %v482
        %569 = vst [vmem:[%s231 + $0x28] sm:$0xff] %v484
        %570 = vst [vmem:[%s231 + $0x30] sm:$0xff] %v488
        %571 = vst [vmem:[%s231 + $0x38] sm:$0xff] %v490
        %572 = vst [vmem:[%s231 + $0x40] sm:$0xff] %v494
        %573 = vst [vmem:[%s231 + $0x48] sm:$0xff] %v496
        %574 = vst [vmem:[%s231 + $0x50] sm:$0xff] %v500
        %575 = vst [vmem:[%s231 + $0x58] sm:$0xff] %v502
        %576 = vst [vmem:[%s231 + $0x60] sm:$0xff] %v506
        %577 = vst [vmem:[%s231 + $0x68] sm:$0xff] %v508
        %578 = vst [vmem:[%s231 + $0x70] sm:$0xff] %v512
        %579 = vst [vmem:[%s231 + $0x78] sm:$0xff] %v514
        %580 = vst [vmem:[%s231 + $0x80] sm:$0xff] %v518
        %581 = vst [vmem:[%s231 + $0x88] sm:$0xff] %v520
        %582 = vst [vmem:[%s231 + $0x90] sm:$0xff] %v524
        %583 = vst [vmem:[%s231 + $0x98] sm:$0xff] %v526
        %584 = vst [vmem:[%s231 + $0xa0] sm:$0xff] %v530
        %585 = vst [vmem:[%s231 + $0xa8] sm:$0xff] %v532
        %586 = vst [vmem:[%s231 + $0xb0] sm:$0xff] %v536
        %587 = vst [vmem:[%s231 + $0xb8] sm:$0xff] %v538
        %588 = vst [vmem:[%s231 + $0xc0] sm:$0xff] %v542
        %589 = vst [vmem:[%s231 + $0xc8] sm:$0xff] %v544
        %590 = vst [vmem:[%s231 + $0xd0] sm:$0xff] %v548
        %591 = vst [vmem:[%s231 + $0xd8] sm:$0xff] %v550
        %592 = vst [vmem:[%s231 + $0xe0] sm:$0xff] %v554
        %593 = vst [vmem:[%s231 + $0xe8] sm:$0xff] %v556
        %594 = vst [vmem:[%s231 + $0xf0] sm:$0xff] %v560
        %595 = vst [vmem:[%s231 + $0xf8] sm:$0xff] %v562
        %s596 = sand.u32 %s107, 1
        %s597 = sand.u32 %s107, 1
        %s598 = smul.addr %s597, 256
        %s599 = scalar_lea.vmem [#allocation5], %s598
        // Predicated region
        $region60: #{single_deconv3d_block.1} parent=50 // pred_check
          %p600 = pneg %p117
        $region61: #{single_deconv3d_block.1} parent=50 // pred_check_branch
          %602 = sbr.rel (%p600) target = $region63
        $region62: #{single_deconv3d_block.1} parent=50 // pred_region
          %s603 = smul.u32 2, %s19
          %s604 = smul.addr %s20, 64
          %s605 = sadd.s32 %s603, %s604
          %s606 = smul.addr %s605, 8
          %s607 = scalar_lea.vmem %s3, %s606
          // Predicated region
          $region64: #{single_deconv3d_block.1} parent=62 // pred_check
            _
          $region65: #{single_deconv3d_block.1} parent=62 // pred_check_branch
            %609 = sbr.rel (0) target = $region67
          $region66: #{single_deconv3d_block.1} parent=62 // pred_region
            // Predicated region
            $region68: #{single_deconv3d_block.1} parent=66 // pred_check
              _
            $region69: #{single_deconv3d_block.1} parent=66 // pred_check_branch
              %611 = sbr.rel (0) target = $region71
            $region70: #{single_deconv3d_block.1} parent=66 // pred_region
              loop: start=0, step=1, limit=1
              $region72: #{single_deconv3d_block.1} parent=70 // loop_pre_header
                _
              $region73: #{single_deconv3d_block.1} parent=70 // loop_header
                %s613 = sphi 0, %s617
                %p614 = scmp.ge.s32.totalorder %s613, 1
                %s618 = sphi %s599, %s599
                %s619 = sphi %s607, %s607
              $region74: #{single_deconv3d_block.1} parent=70 // loop_header_branch
                %616 = sbr.rel (%p614) target = $region78
              $region75: #{single_deconv3d_block.1} parent=70 // loop_body
                %v620 = vld [vmem:[%s618] sm:$0xff]
                %621 = vst [vmem:[%s619] sm:$0xff] %v620
                %v622 = vld [vmem:[%s618 + $0x8] sm:$0xff]
                %623 = vst [vmem:[%s619 + $0x8] sm:$0xff] %v622
                %v624 = vld [vmem:[%s618 + $0x10] sm:$0xff]
                %625 = vst [vmem:[%s619 + $0x20] sm:$0xff] %v624
                %v626 = vld [vmem:[%s618 + $0x18] sm:$0xff]
                %627 = vst [vmem:[%s619 + $0x28] sm:$0xff] %v626
                %v628 = vld [vmem:[%s618 + $0x20] sm:$0xff]
                %629 = vst [vmem:[%s619 + $0x40] sm:$0xff] %v628
                %v630 = vld [vmem:[%s618 + $0x28] sm:$0xff]
                %631 = vst [vmem:[%s619 + $0x48] sm:$0xff] %v630
                %v632 = vld [vmem:[%s618 + $0x30] sm:$0xff]
                %633 = vst [vmem:[%s619 + $0x60] sm:$0xff] %v632
                %v634 = vld [vmem:[%s618 + $0x38] sm:$0xff]
                %635 = vst [vmem:[%s619 + $0x68] sm:$0xff] %v634
                %v636 = vld [vmem:[%s618 + $0x40] sm:$0xff]
                %637 = vst [vmem:[%s619 + $0x80] sm:$0xff] %v636
                %v638 = vld [vmem:[%s618 + $0x48] sm:$0xff]
                %639 = vst [vmem:[%s619 + $0x88] sm:$0xff] %v638
                %v640 = vld [vmem:[%s618 + $0x50] sm:$0xff]
                %641 = vst [vmem:[%s619 + $0xa0] sm:$0xff] %v640
                %v642 = vld [vmem:[%s618 + $0x58] sm:$0xff]
                %643 = vst [vmem:[%s619 + $0xa8] sm:$0xff] %v642
                %v644 = vld [vmem:[%s618 + $0x60] sm:$0xff]
                %645 = vst [vmem:[%s619 + $0xc0] sm:$0xff] %v644
                %v646 = vld [vmem:[%s618 + $0x68] sm:$0xff]
                %647 = vst [vmem:[%s619 + $0xc8] sm:$0xff] %v646
                %v648 = vld [vmem:[%s618 + $0x70] sm:$0xff]
                %649 = vst [vmem:[%s619 + $0xe0] sm:$0xff] %v648
                %v650 = vld [vmem:[%s618 + $0x78] sm:$0xff]
                %651 = vst [vmem:[%s619 + $0xe8] sm:$0xff] %v650
                %v652 = vld [vmem:[%s618 + $0x80] sm:$0xff]
                %653 = vst [vmem:[%s619 + $0x100] sm:$0xff] %v652
                %v654 = vld [vmem:[%s618 + $0x88] sm:$0xff]
                %655 = vst [vmem:[%s619 + $0x108] sm:$0xff] %v654
                %v656 = vld [vmem:[%s618 + $0x90] sm:$0xff]
                %657 = vst [vmem:[%s619 + $0x120] sm:$0xff] %v656
                %v658 = vld [vmem:[%s618 + $0x98] sm:$0xff]
                %659 = vst [vmem:[%s619 + $0x128] sm:$0xff] %v658
                %v660 = vld [vmem:[%s618 + $0xa0] sm:$0xff]
                %661 = vst [vmem:[%s619 + $0x140] sm:$0xff] %v660
                %v662 = vld [vmem:[%s618 + $0xa8] sm:$0xff]
                %663 = vst [vmem:[%s619 + $0x148] sm:$0xff] %v662
                %v664 = vld [vmem:[%s618 + $0xb0] sm:$0xff]
                %665 = vst [vmem:[%s619 + $0x160] sm:$0xff] %v664
                %v666 = vld [vmem:[%s618 + $0xb8] sm:$0xff]
                %667 = vst [vmem:[%s619 + $0x168] sm:$0xff] %v666
                %v668 = vld [vmem:[%s618 + $0xc0] sm:$0xff]
                %669 = vst [vmem:[%s619 + $0x180] sm:$0xff] %v668
                %v670 = vld [vmem:[%s618 + $0xc8] sm:$0xff]
                %671 = vst [vmem:[%s619 + $0x188] sm:$0xff] %v670
                %v672 = vld [vmem:[%s618 + $0xd0] sm:$0xff]
                %673 = vst [vmem:[%s619 + $0x1a0] sm:$0xff] %v672
                %v674 = vld [vmem:[%s618 + $0xd8] sm:$0xff]
                %675 = vst [vmem:[%s619 + $0x1a8] sm:$0xff] %v674
                %v676 = vld [vmem:[%s618 + $0xe0] sm:$0xff]
                %677 = vst [vmem:[%s619 + $0x1c0] sm:$0xff] %v676
                %v678 = vld [vmem:[%s618 + $0xe8] sm:$0xff]
                %679 = vst [vmem:[%s619 + $0x1c8] sm:$0xff] %v678
                %v680 = vld [vmem:[%s618 + $0xf0] sm:$0xff]
                %681 = vst [vmem:[%s619 + $0x1e0] sm:$0xff] %v680
                %v682 = vld [vmem:[%s618 + $0xf8] sm:$0xff]
                %683 = vst [vmem:[%s619 + $0x1e8] sm:$0xff] %v682
              $region76: #{single_deconv3d_block.1} parent=70 // loop_footer
                %s617 = sadd.s32 1, %s613
              $region77: #{single_deconv3d_block.1} parent=70 // loop_footer_branch
                %612 = sbr.rel target = $region73
              $region78: #{single_deconv3d_block.1} parent=70 // loop_exit
                _
            $region71: #{single_deconv3d_block.1} parent=66 // pred_fallthru
              _
            // Predicated region
            $region79: #{single_deconv3d_block.1} parent=66 // pred_check
              _
            $region80: #{single_deconv3d_block.1} parent=66 // pred_check_branch
              %685 = sbr.rel target = $region82
            $region81: #{single_deconv3d_block.1} parent=66 // pred_region
              _
            $region82: #{single_deconv3d_block.1} parent=66 // pred_fallthru
              _
          $region67: #{single_deconv3d_block.1} parent=62 // pred_fallthru
            _
          %686 = vnop
        $region63: #{single_deconv3d_block.1} parent=50 // pred_fallthru
          _
      $region51: #{single_deconv3d_block.1} parent=5 // pred_fallthru
        _
      %p687 = scmp.le.s32.totalorder 2, %s10
      // Predicated region
      $region83: #{single_deconv3d_block.1} parent=5 // pred_check
        %p688 = pneg %p687
      $region84: #{single_deconv3d_block.1} parent=5 // pred_check_branch
        %690 = sbr.rel (%p688) target = $region86
      $region85: #{single_deconv3d_block.1} parent=5 // pred_region
        %s691 = ssub.s32 %s10, 2
        // Predicated region
        $region87: #{single_deconv3d_block.1} parent=85 // pred_check
          %p692 = pneg %p123
        $region88: #{single_deconv3d_block.1} parent=85 // pred_check_branch
          %694 = sbr.rel (%p692) target = $region90
        $region89: #{single_deconv3d_block.1} parent=85 // pred_region
          %s695 = sand.u32 %s108, 1
          %s696 = sand.u32 %s108, 1
          %s697 = smul.addr %s696, 256
          %s698 = scalar_lea.vmem [#allocation5], %s697
        $region90: #{single_deconv3d_block.1} parent=85 // pred_fallthru
          _
      $region86: #{single_deconv3d_block.1} parent=5 // pred_fallthru
        _
    $region6: #{single_deconv3d_block.1} parent=1 // loop_footer
      %s14 = sadd.s32 1, %s10
    $region7: #{single_deconv3d_block.1} parent=1 // loop_footer_branch
      %9 = sbr.rel target = $region3
    $region8: #{single_deconv3d_block.1} parent=1 // loop_exit
      _
    %699 = vsyncpa [#allocation4], 1
    %s700 = scalar_lea.sflag [#allocation4], 1
    %701 = vsyncpa %s700, 1

</llo_original>
